<compile_context>
chip_gen: v6e
topology: v6e:2x2x1
jax: 0.10.0
libtpu: 0.0.40
codegen_flags: <defaults>
</compile_context>

<pallas_src>
import functools

import jax
import jax.numpy as jnp
from jax import lax
from jax.experimental import pallas as pl
from jax.experimental.pallas import tpu as pltpu


def _transition_kernel(x_ref, w1_ref, pgb_ref, w2_ref, b2_ref, mu_ref, *,
                       h_true):
    """One batch tile: fc -> LayerNorm -> ReLU -> fc_mu."""
    # fc: x @ W1 + b1  (bf16 operands, f32 accumulation on the MXU)
    h = jnp.dot(x_ref[...], w1_ref[...], preferred_element_type=jnp.float32)
    h = h + pgb_ref[0:1, :]                               # + b1

    # LayerNorm over the true feature width h_true (torch default eps=1e-5).
    # Pad lanes of h are exactly zero (W1 pad columns / b1 pad are zero), so
    # the sums only need the true-H denominator; the variance additionally
    # masks the (h - mean) contribution of pad lanes.
    h_pad = h.shape[-1]
    inv_h = 1.0 / float(h_true)
    mean = jnp.sum(h, axis=-1, keepdims=True) * inv_h
    hc = h - mean
    if h_pad != h_true:
        lane = lax.broadcasted_iota(jnp.int32, h.shape, 1)
        hc = jnp.where(lane < h_true, hc, 0.0)
    var = jnp.sum(hc * hc, axis=-1, keepdims=True) * inv_h
    h_norm = hc * lax.rsqrt(var + 1e-5)
    h_norm = h_norm * pgb_ref[1:2, :] + pgb_ref[2:3, :]   # * gamma + beta

    # ReLU
    h_relu = jnp.maximum(h_norm, 0.0)

    # fc_mu: h_relu @ W2 + b2  (bf16 operands, f32 accumulation)
    mu = jnp.dot(h_relu.astype(w2_ref.dtype), w2_ref[...],
                 preferred_element_type=jnp.float32) + b2_ref[...]
    mu_ref[...] = mu.astype(mu_ref.dtype)


def deterministic_transition_forward(x, w1, b1, gamma, beta, w2, b2, *,
                                     block_b=1024, out_dtype=jnp.float32):
    """Pallas implementation of DeterministicTransitionModel.forward.

    x:  [B, encoder_feature_dim + action_shape]  float32
    returns (mu, None) with mu: [B, encoder_feature_dim]
    """
    B, Din = x.shape
    H = w1.shape[1]
    Dout = w2.shape[1]

    LANE = 128
    H_PAD = max(LANE, pl.cdiv(H, LANE) * LANE)        # lane-dense hidden width
    DOUT_PAD = max(LANE, pl.cdiv(Dout, LANE) * LANE)  # lane-dense mu stores

    # Batch tile: multiple of 8 (or the full batch when B <= 8).  When B > 8
    # guarantee >= 2 grid steps so the "parallel" batch axis can span both
    # v7x TensorCores.  Ragged last tiles are handled by Pallas' masked
    # boundary loads/stores -- no wrapper-side zero-pad copy of x.
    if B <= 8:
        tb = B
    else:
        tb = min(block_b, pl.cdiv(B, 8) * 8)
        tb = pl.cdiv(tb, 8) * 8
        if pl.cdiv(B, tb) < 2:
            tb = max(8, pl.cdiv(pl.cdiv(B, 2), 8) * 8)
    grid_b = pl.cdiv(B, tb)

    f32, bf16 = jnp.float32, jnp.bfloat16

    # One-time wrapper-side packing / casting (cheap XLA ops, outside kernel).
    x_bf = x.astype(bf16)

    w1_bf = w1.astype(bf16)
    if H_PAD != H:
        w1_bf = jnp.zeros((Din, H_PAD), bf16).at[:, :H].set(w1_bf)

    pgb = jnp.zeros((3, H_PAD), f32)
    pgb = pgb.at[0, :H].set(b1.reshape(H).astype(f32))      # b1
    pgb = pgb.at[1, :H].set(gamma.reshape(H).astype(f32))   # gamma
    pgb = pgb.at[2, :H].set(beta.reshape(H).astype(f32))    # beta

    w2_bf = jnp.zeros((H_PAD, DOUT_PAD), bf16).at[:H, :Dout].set(
        w2.astype(bf16))
    b2_p = jnp.zeros((1, DOUT_PAD), f32).at[0, :Dout].set(
        b2.reshape(Dout).astype(f32))

    out_itemsize = jnp.dtype(out_dtype).itemsize
    cost = pl.CostEstimate(
        flops=2 * B * (Din * H_PAD + H_PAD * DOUT_PAD) + 8 * B * H_PAD,
        transcendentals=B,
        bytes_accessed=(x_bf.size * 2 + w1_bf.size * 2 + pgb.size * 4 +
                        w2_bf.size * 2 + b2_p.size * 4 +
                        B * DOUT_PAD * out_itemsize),
    )

    invariant = pl.Buffered(buffer_count=1)   # weights don't need a 2nd buffer

    mu_pad = pl.pallas_call(
        functools.partial(_transition_kernel, h_true=H),
        out_shape=jax.ShapeDtypeStruct((B, DOUT_PAD), out_dtype),
        grid=(grid_b,),
        in_specs=[
            pl.BlockSpec((tb, Din), lambda i: (i, 0)),            # x (pipelined)
            pl.BlockSpec((Din, H_PAD), lambda i: (0, 0),
                         pipeline_mode=invariant),                # W1
            pl.BlockSpec((3, H_PAD), lambda i: (0, 0),
                         pipeline_mode=invariant),                # b1/gamma/beta
            pl.BlockSpec((H_PAD, DOUT_PAD), lambda i: (0, 0),
                         pipeline_mode=invariant),                # W2
            pl.BlockSpec((1, DOUT_PAD), lambda i: (0, 0),
                         pipeline_mode=invariant),                # b2
        ],
        out_specs=pl.BlockSpec((tb, DOUT_PAD), lambda i: (i, 0)),
        compiler_params=pltpu.CompilerParams(
            dimension_semantics=("parallel",)),
        cost_estimate=cost,
    )(x_bf, w1_bf, pgb, w2_bf, b2_p)

    mu = mu_pad if DOUT_PAD == Dout else mu_pad[:, :Dout]
    return mu, None


def init_params(key, encoder_feature_dim, action_shape, layer_width):
    """Deterministic init mirroring torch's default Linear init (U(-k, k))."""
    din = encoder_feature_dim + action_shape
    k1, k2, k3, k4 = jax.random.split(key, 4)

    bound1 = 1.0 / jnp.sqrt(din)
    w1 = jax.random.uniform(k1, (din, layer_width), jnp.float32, -bound1, bound1)
    b1 = jax.random.uniform(k2, (1, layer_width), jnp.float32, -bound1, bound1)

    gamma = jnp.ones((1, layer_width), jnp.float32)
    beta = jnp.zeros((1, layer_width), jnp.float32)

    bound2 = 1.0 / jnp.sqrt(layer_width)
    w2 = jax.random.uniform(k3, (layer_width, encoder_feature_dim), jnp.float32,
                            -bound2, bound2)
    b2 = jax.random.uniform(k4, (1, encoder_feature_dim), jnp.float32,
                            -bound2, bound2)
    return w1, b1, gamma, beta, w2, b2


def reference_forward(x, w1, b1, gamma, beta, w2, b2):
    """Plain-JAX reference, matching the kernel's bf16-operand / f32-acc math."""
    h = jnp.dot(x.astype(jnp.bfloat16), w1.astype(jnp.bfloat16),
                preferred_element_type=jnp.float32) + b1
    mean = jnp.mean(h, axis=-1, keepdims=True)
    var = jnp.mean((h - mean) ** 2, axis=-1, keepdims=True)
    h = (h - mean) * lax.rsqrt(var + 1e-5) * gamma + beta
    h = jnp.maximum(h, 0.0)
    return jnp.dot(h.astype(jnp.bfloat16), w2.astype(jnp.bfloat16),
                   preferred_element_type=jnp.float32) + b2


if __name__ == "__main__":
    # NOTE: at toy shapes like these the pallas_call is pure launch overhead;
    # it only pays off once the batch grid has several steps per call (or many
    # transition evaluations are stacked on the batch axis before calling).
    encoder_feature_dim = 32
    action_shape = 4
    layer_width = 64
    batch = 16          # > 8 so the batch grid has 2 steps (exercises megacore path)

    key = jax.random.PRNGKey(0)
    k_params, k_x = jax.random.split(key)

    params = init_params(k_params, encoder_feature_dim, action_shape, layer_width)
    x = jax.random.normal(k_x, (batch, encoder_feature_dim + action_shape),
                          jnp.float32)

    mu, sigma = deterministic_transition_forward(x, *params)
    mu = jax.block_until_ready(mu)

    # correctness check against plain-JAX reference (same bf16/f32-acc recipe)
    mu_ref = reference_forward(x, *params)
    assert mu.shape == (batch, encoder_feature_dim)
    assert sigma is None
    assert jnp.allclose(mu, mu_ref, atol=2e-3, rtol=2e-3), (
        float(jnp.max(jnp.abs(mu - mu_ref))))

    print("KERNEL_OK")
</pallas_src>

<mosaic_0001>
module attributes {stable_mosaic.version = 11 : i64} {
  func.func @_transition_kernel(%arg0: i32, %arg1: memref<8x36xbf16, #tpu.memory_space<vmem>>, %arg2: memref<36x128xbf16, #tpu.memory_space<vmem>>, %arg3: memref<3x128xf32, #tpu.memory_space<vmem>>, %arg4: memref<128x128xbf16, #tpu.memory_space<vmem>>, %arg5: memref<1x128xf32, #tpu.memory_space<vmem>>, %arg6: memref<8x128xf32, #tpu.memory_space<vmem>>) attributes {dimension_semantics = [#tpu.dimension_semantics<parallel>], iteration_bounds = array<i64: 2>, scalar_prefetch = 0 : i64, scratch_operands = 0 : i64, tpu.core_type = #tpu.core_type<tc>, window_params = [{transform_indices = @transform_0, window_bounds = array<i64: 8, 36>}, {pipeline_mode = #tpu.pipeline_mode<synchronous>, transform_indices = @transform_1, window_bounds = array<i64: 36, 128>}, {pipeline_mode = #tpu.pipeline_mode<synchronous>, transform_indices = @transform_2, window_bounds = array<i64: 3, 128>}, {pipeline_mode = #tpu.pipeline_mode<synchronous>, transform_indices = @transform_3, window_bounds = array<i64: 128, 128>}, {pipeline_mode = #tpu.pipeline_mode<synchronous>, transform_indices = @transform_4, window_bounds = array<i64: 1, 128>}, {transform_indices = @transform_5, window_bounds = array<i64: 8, 128>}]} {
    %c0 = arith.constant 0 : index
    %c0_0 = arith.constant 0 : index
    %0 = vector.load %arg1[%c0, %c0_0] : memref<8x36xbf16, #tpu.memory_space<vmem>>, vector<8x36xbf16>
    %c0_1 = arith.constant 0 : index
    %c0_2 = arith.constant 0 : index
    %1 = vector.load %arg2[%c0_1, %c0_2] : memref<36x128xbf16, #tpu.memory_space<vmem>>, vector<36x128xbf16>
    %cst = arith.constant dense<0.000000e+00> : vector<8x128xf32>
    %2 = tpu.matmul %0, %1, %cst {dimension_numbers = #tpu.dot_dimension_numbers<[1], [0], [0], [1], [0, 0, 1, 1], [], []>} : vector<8x36xbf16>, vector<36x128xbf16>, vector<8x128xf32> -> vector<8x128xf32>
    %c0_3 = arith.constant 0 : index
    %c0_4 = arith.constant 0 : index
    %3 = vector.load %arg3[%c0_3, %c0_4] : memref<3x128xf32, #tpu.memory_space<vmem>>, vector<1x128xf32>
    %4 = vector.broadcast %3 : vector<1x128xf32> to vector<8x128xf32>
    %5 = arith.addf %2, %4 : vector<8x128xf32>
    %cst_5 = arith.constant dense<0.000000e+00> : vector<8xf32>
    %6 = vector.multi_reduction <add>, %5, %cst_5 [1] : vector<8x128xf32> to vector<8xf32>
    %7 = vector.shape_cast %6 : vector<8xf32> to vector<8x1xf32>
    %cst_6 = arith.constant 1.562500e-02 : f32
    %8 = vector.broadcast %cst_6 : f32 to vector<8x1xf32>
    %9 = arith.mulf %7, %8 : vector<8x1xf32>
    %10 = vector.broadcast %9 : vector<8x1xf32> to vector<8x128xf32>
    %11 = arith.subf %5, %10 : vector<8x128xf32>
    %12 = tpu.iota {dimensions = array<i32: 1>} : vector<8x128xi32>
    %c64_i32 = arith.constant 64 : i32
    %13 = vector.broadcast %c64_i32 : i32 to vector<8x128xi32>
    %14 = arith.cmpi slt, %12, %13 : vector<8x128xi32>
    %cst_7 = arith.constant 0.000000e+00 : f32
    %15 = vector.broadcast %cst_7 : f32 to vector<8x128xf32>
    %16 = arith.select %14, %11, %15 : vector<8x128xi1>, vector<8x128xf32>
    %17 = arith.mulf %16, %16 : vector<8x128xf32>
    %cst_8 = arith.constant dense<0.000000e+00> : vector<8xf32>
    %18 = vector.multi_reduction <add>, %17, %cst_8 [1] : vector<8x128xf32> to vector<8xf32>
    %19 = vector.shape_cast %18 : vector<8xf32> to vector<8x1xf32>
    %cst_9 = arith.constant 1.562500e-02 : f32
    %20 = vector.broadcast %cst_9 : f32 to vector<8x1xf32>
    %21 = arith.mulf %19, %20 : vector<8x1xf32>
    %cst_10 = arith.constant 9.99999974E-6 : f32
    %22 = vector.broadcast %cst_10 : f32 to vector<8x1xf32>
    %23 = arith.addf %21, %22 : vector<8x1xf32>
    %24 = math.rsqrt %23 : vector<8x1xf32>
    %25 = vector.broadcast %24 : vector<8x1xf32> to vector<8x128xf32>
    %26 = arith.mulf %16, %25 : vector<8x128xf32>
    %c1 = arith.constant 1 : index
    %c0_11 = arith.constant 0 : index
    %27 = vector.load %arg3[%c1, %c0_11] : memref<3x128xf32, #tpu.memory_space<vmem>>, vector<1x128xf32>
    %28 = vector.broadcast %27 : vector<1x128xf32> to vector<8x128xf32>
    %29 = arith.mulf %26, %28 : vector<8x128xf32>
    %c2 = arith.constant 2 : index
    %c0_12 = arith.constant 0 : index
    %30 = vector.load %arg3[%c2, %c0_12] : memref<3x128xf32, #tpu.memory_space<vmem>>, vector<1x128xf32>
    %31 = vector.broadcast %30 : vector<1x128xf32> to vector<8x128xf32>
    %32 = arith.addf %29, %31 : vector<8x128xf32>
    %cst_13 = arith.constant 0.000000e+00 : f32
    %33 = vector.broadcast %cst_13 : f32 to vector<8x128xf32>
    %34 = arith.maximumf %32, %33 : vector<8x128xf32>
    %35 = arith.truncf %34 : vector<8x128xf32> to vector<8x128xbf16>
    %c0_14 = arith.constant 0 : index
    %c0_15 = arith.constant 0 : index
    %36 = vector.load %arg4[%c0_14, %c0_15] : memref<128x128xbf16, #tpu.memory_space<vmem>>, vector<128x128xbf16>
    %cst_16 = arith.constant dense<0.000000e+00> : vector<8x128xf32>
    %37 = tpu.matmul %35, %36, %cst_16 {dimension_numbers = #tpu.dot_dimension_numbers<[1], [0], [0], [1], [0, 0, 1, 1], [], []>} : vector<8x128xbf16>, vector<128x128xbf16>, vector<8x128xf32> -> vector<8x128xf32>
    %c0_17 = arith.constant 0 : index
    %c0_18 = arith.constant 0 : index
    %38 = vector.load %arg5[%c0_17, %c0_18] : memref<1x128xf32, #tpu.memory_space<vmem>>, vector<1x128xf32>
    %39 = vector.broadcast %38 : vector<1x128xf32> to vector<8x128xf32>
    %40 = arith.addf %37, %39 : vector<8x128xf32>
    %c0_19 = arith.constant 0 : index
    %c0_20 = arith.constant 0 : index
    %41 = vector.load %arg6[%c0_19, %c0_20] : memref<8x128xf32, #tpu.memory_space<vmem>>, vector<8x128xf32>
    tpu.vector_store %arg6[%c0_19, %c0_20], %40 {strides = array<i32>} : memref<8x128xf32, #tpu.memory_space<vmem>>, vector<8x128xf32>,
    return
  }
  func.func @transform_0(%arg0: i32) -> (i32, i32) {
    %c0_i32 = arith.constant 0 : i32
    %c0_i32_0 = arith.constant 0 : i32
    return %arg0, %c0_i32 : i32, i32
  }
  func.func @transform_1(%arg0: i32) -> (i32, i32) {
    %c0_i32 = arith.constant 0 : i32
    %c0_i32_0 = arith.constant 0 : i32
    %c0_i32_1 = arith.constant 0 : i32
    return %c0_i32, %c0_i32_0 : i32, i32
  }
  func.func @transform_2(%arg0: i32) -> (i32, i32) {
    %c0_i32 = arith.constant 0 : i32
    %c0_i32_0 = arith.constant 0 : i32
    %c0_i32_1 = arith.constant 0 : i32
    return %c0_i32, %c0_i32_0 : i32, i32
  }
  func.func @transform_3(%arg0: i32) -> (i32, i32) {
    %c0_i32 = arith.constant 0 : i32
    %c0_i32_0 = arith.constant 0 : i32
    %c0_i32_1 = arith.constant 0 : i32
    return %c0_i32, %c0_i32_0 : i32, i32
  }
  func.func @transform_4(%arg0: i32) -> (i32, i32) {
    %c0_i32 = arith.constant 0 : i32
    %c0_i32_0 = arith.constant 0 : i32
    %c0_i32_1 = arith.constant 0 : i32
    return %c0_i32, %c0_i32_0 : i32, i32
  }
  func.func @transform_5(%arg0: i32) -> (i32, i32) {
    %c0_i32 = arith.constant 0 : i32
    %c0_i32_0 = arith.constant 0 : i32
    return %arg0, %c0_i32 : i32, i32
  }
}

</mosaic_0001>

<llo_original>
// kernel: tpu_custom_call.1
$region0: #{tpu_custom_call.1}
  #allocation0 [shape = 'u32[]', space=smem, size = 0x4, offset = 0x4, fixed_abs, tag = 'smem constant byte address 0x4 - core index']
  #allocation1 [shape = 'u32[144,128]{1,0:T(1,128)}', space=vmem, size = 0x12000, scoped, tag = 'internal scratch']
  %s0 = inlined_call_operand.hbm [shape: bf16[16,36], index: 0, kind: input, shape index: {}]
  %s1 = inlined_call_operand.hbm [shape: bf16[36,128], index: 1, kind: input, shape index: {}]
  %s2 = inlined_call_operand.hbm [shape: f32[3,128], index: 2, kind: input, shape index: {}]
  %s3 = inlined_call_operand.hbm [shape: bf16[128,128], index: 3, kind: input, shape index: {}]
  %s4 = inlined_call_operand.vmem [shape: f32[1,128], index: 4, kind: input, shape index: {}]
  %s5 = inlined_call_operand.hbm [shape: f32[16,128], index: 5, kind: output, shape index: {}]
  %s6 = sld [smem:[#allocation0]]
  $region69: #{tpu_custom_call.1} parent=0
    _
  %s8 = ssub.s32 1, %s6
  %s9 = scalar_select 0, %s8, %s6
  $region1: #{tpu_custom_call.1} parent=0
    #allocation2 [shape = 'u8[4096]{0}', space=vmem, size = 0x1000, scoped, tag = 'input window, operand 0']
    #allocation3 [shape = 's32[2]{0}', space=sflag, size = 0x8, scoped, tag = 'scoped memory for tpu_custom_call.1']
    #allocation4 [shape = 's32[2]{0}', space=sflag, size = 0x8, scoped, tag = 'scoped memory for tpu_custom_call.1']
    #allocation5 [shape = 'u8[10240]{0}', space=vmem, size = 0x2800, scoped, tag = 'input window, operand 1, single buffered']
    #allocation6 [shape = 's32[1]{0}', space=sflag, size = 0x4, scoped, tag = 'scoped memory for tpu_custom_call.1']
    #allocation7 [shape = 'u8[2048]{0}', space=vmem, size = 0x800, scoped, tag = 'input window, operand 2, single buffered']
    #allocation8 [shape = 'u8[32768]{0}', space=vmem, size = 0x8000, scoped, tag = 'input window, operand 3, single buffered']
    #allocation9 [shape = 's32[1]{0}', space=sflag, size = 0x4, scoped, tag = 'scoped memory for tpu_custom_call.1']
    #allocation10 [shape = 'u8[8192]{0}', space=vmem, size = 0x2000, scoped, tag = 'output window, operand 0']
    %10 = vsyncpa [#allocation3], 0
    %s11 = scalar_lea.sflag [#allocation3], 1
    %12 = vsyncpa %s11, 0
    %13 = vsyncpa [#allocation6], 0
    %14 = vsyncpa [#allocation9], 0
    %15 = vsyncpa [#allocation4], 0
    %s16 = scalar_lea.sflag [#allocation4], 1
    %17 = vsyncpa %s16, 0
    loop: start=0, step=1, limit=4
    $region2: #{tpu_custom_call.1} parent=1 // loop_pre_header
      _
    $region3: #{tpu_custom_call.1} parent=1 // loop_header
      %s19 = sphi 0, %s23
      %p20 = scmp.ge.s32.totalorder %s19, 4
      %s29 = sphi 0, %s31
      %s32 = sphi 0, %s29
      %s33 = sphi 0, %s32
      %s49 = sphi 0, %s33
      %s53 = sphi 0, %s53
      %s55 = sphi 0, %s53
      %s56 = sphi 0, %s55
      %s70 = sphi 0, %s56
      %s74 = sphi 0, %s74
      %s76 = sphi 0, %s74
      %s77 = sphi 0, %s76
      %s91 = sphi 0, %s77
      %s95 = sphi 0, %s95
      %s97 = sphi 0, %s95
      %s98 = sphi 0, %s97
      %s112 = sphi 0, %s98
      %s116 = sphi 0, %s116
      %s118 = sphi 0, %s116
      %s119 = sphi 0, %s118
      %s133 = sphi 0, %s119
      %s139 = sphi 0, %s141
      %s142 = sphi 0, %s139
      %s143 = sphi 0, %s142
      %s159 = sphi 0, %s143
    $region4: #{tpu_custom_call.1} parent=1 // loop_header_branch
      %22 = sbr.rel (%p20) target = $region8
    $region5: #{tpu_custom_call.1} parent=1 // loop_body
      %s24 = ssub.s32 %s19, 1
      %s25 = ssub.s32 %s19, 2
      %s26 = sadd.s32 %s19, 1
      %s27 = ssub.s32 %s19, %s26
      %p28 = scmp.eq.s32.totalorder %s27, 0
      %s30 = sadd.s32 %s29, 1
      %s31 = scalar_select %p28, %s29, %s30
      %p34 = pneg %p28
      %p35 = scmp.eq.s32.totalorder %s19, 1
      %p36 = por %p34, %p35
      %p37 = scmp.ne.s32.totalorder %s29, %s32
      %p38 = scmp.eq.s32.totalorder %s19, 0
      %p39 = por %p37, %p38
      %p40 = scmp.ne.s32.totalorder %s29, %s32
      %p41 = scmp.eq.s32.totalorder %s24, 1
      %p42 = por %p40, %p41
      %p43 = scmp.ne.s32.totalorder %s32, %s33
      %p44 = scmp.eq.s32.totalorder %s24, 0
      %p45 = por %p43, %p44
      %p46 = scmp.ne.s32.totalorder %s32, %s33
      %p47 = scmp.eq.s32.totalorder %s25, 1
      %p48 = por %p46, %p47
      %p50 = scmp.ne.s32.totalorder %s33, %s49
      %p51 = scmp.eq.s32.totalorder %s25, 0
      %p52 = por %p50, %p51
      %s54 = sadd.s32 %s53, 1
      %p57 = scmp.eq.s32.totalorder %s19, 1
      %p58 = scmp.ne.s32.totalorder %s53, %s55
      %p59 = scmp.eq.s32.totalorder %s19, 0
      %p60 = por %p58, %p59
      %p61 = scmp.ne.s32.totalorder %s53, %s55
      %p62 = scmp.eq.s32.totalorder %s24, 1
      %p63 = por %p61, %p62
      %p64 = scmp.ne.s32.totalorder %s55, %s56
      %p65 = scmp.eq.s32.totalorder %s24, 0
      %p66 = por %p64, %p65
      %p67 = scmp.ne.s32.totalorder %s55, %s56
      %p68 = scmp.eq.s32.totalorder %s25, 1
      %p69 = por %p67, %p68
      %p71 = scmp.ne.s32.totalorder %s56, %s70
      %p72 = scmp.eq.s32.totalorder %s25, 0
      %p73 = por %p71, %p72
      %s75 = sadd.s32 %s74, 1
      %p78 = scmp.eq.s32.totalorder %s19, 1
      %p79 = scmp.ne.s32.totalorder %s74, %s76
      %p80 = scmp.eq.s32.totalorder %s19, 0
      %p81 = por %p79, %p80
      %p82 = scmp.ne.s32.totalorder %s74, %s76
      %p83 = scmp.eq.s32.totalorder %s24, 1
      %p84 = por %p82, %p83
      %p85 = scmp.ne.s32.totalorder %s76, %s77
      %p86 = scmp.eq.s32.totalorder %s24, 0
      %p87 = por %p85, %p86
      %p88 = scmp.ne.s32.totalorder %s76, %s77
      %p89 = scmp.eq.s32.totalorder %s25, 1
      %p90 = por %p88, %p89
      %p92 = scmp.ne.s32.totalorder %s77, %s91
      %p93 = scmp.eq.s32.totalorder %s25, 0
      %p94 = por %p92, %p93
      %s96 = sadd.s32 %s95, 1
      %p99 = scmp.eq.s32.totalorder %s19, 1
      %p100 = scmp.ne.s32.totalorder %s95, %s97
      %p101 = scmp.eq.s32.totalorder %s19, 0
      %p102 = por %p100, %p101
      %p103 = scmp.ne.s32.totalorder %s95, %s97
      %p104 = scmp.eq.s32.totalorder %s24, 1
      %p105 = por %p103, %p104
      %p106 = scmp.ne.s32.totalorder %s97, %s98
      %p107 = scmp.eq.s32.totalorder %s24, 0
      %p108 = por %p106, %p107
      %p109 = scmp.ne.s32.totalorder %s97, %s98
      %p110 = scmp.eq.s32.totalorder %s25, 1
      %p111 = por %p109, %p110
      %p113 = scmp.ne.s32.totalorder %s98, %s112
      %p114 = scmp.eq.s32.totalorder %s25, 0
      %p115 = por %p113, %p114
      %s117 = sadd.s32 %s116, 1
      %p120 = scmp.eq.s32.totalorder %s19, 1
      %p121 = scmp.ne.s32.totalorder %s116, %s118
      %p122 = scmp.eq.s32.totalorder %s19, 0
      %p123 = por %p121, %p122
      %p124 = scmp.ne.s32.totalorder %s116, %s118
      %p125 = scmp.eq.s32.totalorder %s24, 1
      %p126 = por %p124, %p125
      %p127 = scmp.ne.s32.totalorder %s118, %s119
      %p128 = scmp.eq.s32.totalorder %s24, 0
      %p129 = por %p127, %p128
      %p130 = scmp.ne.s32.totalorder %s118, %s119
      %p131 = scmp.eq.s32.totalorder %s25, 1
      %p132 = por %p130, %p131
      %p134 = scmp.ne.s32.totalorder %s119, %s133
      %p135 = scmp.eq.s32.totalorder %s25, 0
      %p136 = por %p134, %p135
      %s137 = ssub.s32 %s19, %s26
      %p138 = scmp.eq.s32.totalorder %s137, 0
      %s140 = sadd.s32 %s139, 1
      %s141 = scalar_select %p138, %s139, %s140
      %p144 = pneg %p138
      %p145 = scmp.eq.s32.totalorder %s19, 1
      %p146 = por %p144, %p145
      %p147 = scmp.ne.s32.totalorder %s139, %s142
      %p148 = scmp.eq.s32.totalorder %s19, 0
      %p149 = por %p147, %p148
      %p150 = scmp.ne.s32.totalorder %s139, %s142
      %p151 = scmp.eq.s32.totalorder %s24, 1
      %p152 = por %p150, %p151
      %p153 = scmp.ne.s32.totalorder %s142, %s143
      %p154 = scmp.eq.s32.totalorder %s24, 0
      %p155 = por %p153, %p154
      %p156 = scmp.ne.s32.totalorder %s142, %s143
      %p157 = scmp.eq.s32.totalorder %s25, 1
      %p158 = por %p156, %p157
      %p160 = scmp.ne.s32.totalorder %s143, %s159
      %p161 = scmp.eq.s32.totalorder %s25, 0
      %p162 = por %p160, %p161
      %p163 = scmp.le.s32.totalorder 1, %s19
      %p164 = scmp.lt.s32.totalorder %s19, 3
      %p165 = pnand %p163, %p164
      %p166 = pneg %p165
      // Predicated region
      $region9: #{tpu_custom_call.1} parent=5 // pred_check
        _
      $region10: #{tpu_custom_call.1} parent=5 // pred_check_branch
        %168 = sbr.rel (%p165) target = $region12
      $region11: #{tpu_custom_call.1} parent=5 // pred_region
        %s169 = ssub.s32 %s19, 1
        // Predicated region
        $region13: #{tpu_custom_call.1} parent=11 // pred_check
          %p170 = pneg %p66
        $region14: #{tpu_custom_call.1} parent=11 // pred_check_branch
          %172 = sbr.rel (%p170) target = $region16
        $region15: #{tpu_custom_call.1} parent=11 // pred_region
          %s174 = ssub.s32 320, 320
          %175 = vsyncadd [#allocation6], %s174
          %s176 = sshll.u32 [#allocation5], 4
          %s177 = int_to_ptr.vmem [resolvable:$true] %s176
          %182 = dma.hbm_to_vmem [thread:$0]  %s1, 320, %s177, [#allocation6], 64, 64, 4
        $region16: #{tpu_custom_call.1} parent=11 // pred_fallthru
          _
        // Predicated region
        $region17: #{tpu_custom_call.1} parent=11 // pred_check
          %p183 = pneg %p87
        $region18: #{tpu_custom_call.1} parent=11 // pred_check_branch
          %185 = sbr.rel (%p183) target = $region20
        $region19: #{tpu_custom_call.1} parent=11 // pred_region
          %s187 = ssub.s32 64, 64
          %188 = vsyncadd [#allocation6], %s187
          %s190 = sshll.u32 [#allocation7], 4
          %s191 = int_to_ptr.vmem [resolvable:$true] %s190
          %193 = dma.hbm_to_vmem [thread:$0]  %s2, 64, %s191, [#allocation6]
        $region20: #{tpu_custom_call.1} parent=11 // pred_fallthru
          _
        // Predicated region
        $region21: #{tpu_custom_call.1} parent=11 // pred_check
          %p194 = pneg %p108
        $region22: #{tpu_custom_call.1} parent=11 // pred_check_branch
          %196 = sbr.rel (%p194) target = $region24
        $region23: #{tpu_custom_call.1} parent=11 // pred_region
          %s198 = ssub.s32 1024, 1024
          %199 = vsyncadd [#allocation9], %s198
          %s200 = sshll.u32 [#allocation8], 4
          %s201 = int_to_ptr.vmem [resolvable:$true] %s200
          %206 = dma.hbm_to_vmem [thread:$0]  %s3, 1024, %s201, [#allocation9], 64, 64, 4
        $region24: #{tpu_custom_call.1} parent=11 // pred_fallthru
          _
        // Predicated region
        $region25: #{tpu_custom_call.1} parent=11 // pred_check
          %p207 = pneg %p129
        $region26: #{tpu_custom_call.1} parent=11 // pred_check_branch
          %209 = sbr.rel (%p207) target = $region28
        $region27: #{tpu_custom_call.1} parent=11 // pred_region
          _
        $region28: #{tpu_custom_call.1} parent=11 // pred_fallthru
          _
      $region12: #{tpu_custom_call.1} parent=5 // pred_fallthru
        _
      %p210 = scmp.lt.s32.totalorder %s19, 2
      // Predicated region
      $region29: #{tpu_custom_call.1} parent=5 // pred_check
        %p211 = pneg %p210
      $region30: #{tpu_custom_call.1} parent=5 // pred_check_branch
        %213 = sbr.rel (%p211) target = $region32
      $region31: #{tpu_custom_call.1} parent=5 // pred_region
        // Predicated region
        $region33: #{tpu_custom_call.1} parent=31 // pred_check
          %p214 = pneg %p39
        $region34: #{tpu_custom_call.1} parent=31 // pred_check_branch
          %216 = sbr.rel (%p214) target = $region36
        $region35: #{tpu_custom_call.1} parent=31 // pred_region
          %s217 = sand.u32 %s29, 1
          %s218 = scalar_lea.sflag [#allocation3], %s217
          %s219 = sand.u32 %s29, 1
          %s220 = smul.addr %s219, 4
          %s221 = scalar_lea.vmem [#allocation2], %s220
          %s223 = ssub.s32 64, 64
          %224 = vsyncadd %s218, %s223
          %s225 = smul.addr %s19, 64
          %s226 = scalar_lea.hbm %s0, %s225
          %s228 = sshll.u32 %s221, 4
          %s229 = int_to_ptr.vmem [resolvable:$true] %s228
          %231 = dma.hbm_to_vmem [thread:$0]  %s226, 64, %s229, %s218
        $region36: #{tpu_custom_call.1} parent=31 // pred_fallthru
          _
      $region32: #{tpu_custom_call.1} parent=5 // pred_fallthru
        _
      %p232 = scmp.le.s32.totalorder 1, %s19
      %p233 = scmp.lt.s32.totalorder %s19, 3
      %p234 = pnand %p232, %p233
      %p235 = pneg %p234
      // Predicated region
      $region37: #{tpu_custom_call.1} parent=5 // pred_check
        _
      $region38: #{tpu_custom_call.1} parent=5 // pred_check_branch
        %237 = sbr.rel (%p234) target = $region40
      $region39: #{tpu_custom_call.1} parent=5 // pred_region
        %s238 = ssub.s32 %s19, 1
        %s239 = sand.u32 %s32, 1
        %s240 = scalar_lea.sflag [#allocation3], %s239
        %s241 = sand.u32 %s32, 1
        %s242 = smul.addr %s241, 4
        %s243 = scalar_lea.vmem [#allocation2], %s242
        // Predicated region
        $region41: #{tpu_custom_call.1} parent=39 // pred_check
          %p244 = pneg %p45
        $region42: #{tpu_custom_call.1} parent=39 // pred_check_branch
          %246 = sbr.rel (%p244) target = $region44
        $region43: #{tpu_custom_call.1} parent=39 // pred_region
          %247 = dma.done %s240, 64
        $region44: #{tpu_custom_call.1} parent=39 // pred_fallthru
          _
        // Predicated region
        $region45: #{tpu_custom_call.1} parent=39 // pred_check
          %p248 = pneg %p66
        $region46: #{tpu_custom_call.1} parent=39 // pred_check_branch
          %250 = sbr.rel (%p248) target = $region48
        $region47: #{tpu_custom_call.1} parent=39 // pred_region
          %251 = dma.done [#allocation6], 320
        $region48: #{tpu_custom_call.1} parent=39 // pred_fallthru
          _
        // Predicated region
        $region49: #{tpu_custom_call.1} parent=39 // pred_check
          %p252 = pneg %p87
        $region50: #{tpu_custom_call.1} parent=39 // pred_check_branch
          %254 = sbr.rel (%p252) target = $region52
        $region51: #{tpu_custom_call.1} parent=39 // pred_region
          %255 = dma.done [#allocation6], 64
        $region52: #{tpu_custom_call.1} parent=39 // pred_fallthru
          _
        // Predicated region
        $region53: #{tpu_custom_call.1} parent=39 // pred_check
          %p256 = pneg %p108
        $region54: #{tpu_custom_call.1} parent=39 // pred_check_branch
          %258 = sbr.rel (%p256) target = $region56
        $region55: #{tpu_custom_call.1} parent=39 // pred_region
          %259 = dma.done [#allocation9], 1024
        $region56: #{tpu_custom_call.1} parent=39 // pred_fallthru
          _
        %s260 = sand.u32 %s32, 1
        %s261 = scalar_lea.sflag [#allocation3], %s260
        %s262 = sand.u32 %s32, 1
        %s263 = smul.addr %s262, 4
        %s264 = scalar_lea.vmem [#allocation2], %s263
        %p265 = pneg %p45
        %p266 = pneg %p42
        %p267 = pneg %p66
        %p268 = pneg %p63
        %p269 = pneg %p87
        %p270 = pneg %p84
        %p271 = pneg %p108
        %p272 = pneg %p105
        %p273 = pneg %p129
        %p274 = pneg %p126
        %p275 = pneg %p155
        %p276 = pneg %p152
        %s277 = sand.u32 %s142, 1
        %s278 = scalar_lea.sflag [#allocation4], %s277
        %s279 = sand.u32 %s142, 1
        %s280 = smul.addr %s279, 8
        %s281 = scalar_lea.vmem [#allocation10], %s280
        %v283 = vld [vmem:[%s243] sm:$0xf]
        %v284 = vld [vmem:[#allocation5] sm:$0xf]
        %v285 = vld [vmem:[#allocation5 + $0x4] sm:$0xf]
        %v286 = vld [vmem:[#allocation5 + $0x8] sm:$0xf]
        %v287 = vld [vmem:[#allocation5 + $0xc] sm:$0xf]
        %v288 = vld [vmem:[#allocation5 + $0x10] sm:$0x3]
        %v289 = vld [vmem:[#allocation7] sm:$0x1]
        %v290 = vlaneseq
        %v291 = vshrl.u32 %v290, 7
        %v292 = vsub.s32 0, %v291
        %v293 = vrot.slane %v289, %v292
        %v299 = vunpack.c.l.b16 %v284
        %v300 = vunpack.c.l.b16 %v285
        %v301 = vunpack.c.l.b16 %v286
        %v302 = vunpack.c.l.b16 %v287
        %v303 = vunpack.c.l.b16 %v288
        %v304 = vpack.c.b16 %v300, %v299
        %v305 = vpack.c.b16 %v302, %v301
        %v306 = vpack.c.b16 %v303, %v303
        %vm309 = vcmask 293888
        %v311 = vsel %vm309, %v283, 0
        %vm313 = vcmask 1041408
        %v315 = vsel %vm313, %v306, 0
        %317 = vmatprep.subr.bf16.mxu0 0
        %318 = vmatpush1.bf16.msra.mxu0 0
        %319 = vmatprep.subr.bf16.mxu0 0
        %320 = vmatpush1.bf16.msra.mxu0 0
        %321 = vmatprep.subr.bf16.mxu0 0
        %322 = vmatpush1.bf16.msra.mxu0 0
        %323 = vmatprep.subr.bf16.mxu0 0
        %324 = vmatpush1.bf16.msra.mxu0 0
        %325 = vmatprep.subr.bf16.mxu0 0
        %326 = vmatpush1.bf16.msra.mxu0 0
        %327 = vmatprep.subr.bf16.mxu0 0
        %328 = vmatpush1.bf16.msra.mxu0 %v315
        %329 = vmatprep.subr.bf16.mxu0 0
        %330 = vmatpush1.bf16.msra.mxu0 %v305
        %331 = vmatprep.subr.bf16.mxu0 0
        %332 = vmatpush1.bf16.msra.mxu0 %v304
        %333 = vmatprep.subr.bf16.mxu0 0
        %334 = vmatpush2.bf16.msra.mxu0 0
        %335 = vmatprep.subr.bf16.mxu0 0
        %336 = vmatpush2.bf16.msra.mxu0 0
        %337 = vmatprep.subr.bf16.mxu0 0
        %338 = vmatpush2.bf16.msra.mxu0 0
        %339 = vmatprep.subr.bf16.mxu0 0
        %340 = vmatpush2.bf16.msra.mxu0 0
        %341 = vmatprep.subr.bf16.mxu0 0
        %342 = vmatpush2.bf16.msra.mxu0 0
        %343 = vmatprep.subr.bf16.mxu0 0
        %344 = vmatpush2.bf16.msra.mxu0 0
        %345 = vmatprep.subr.bf16.mxu0 0
        %346 = vmatpush2.bf16.msra.mxu0 0
        %347 = vmatprep.subr.bf16.mxu0 0
        %348 = vmatpush2.bf16.msra.mxu0 0
        %349 = vmatprep.mubr.bf16.mxu0 0
        %350 = vmatmul.mubr.bf16.gmra.mxu0 %v311
        %v351 = vpop.f32.mrf.mxu0
        %v352 = vadd.f32 %v293, %v351
        %v353 = vpop.f32.mrf.mxu0
        %v354 = vpop.f32.mrf.mxu0
        %v355 = vpop.f32.mrf.mxu0
        %356 = vdwg.mxu0
        %357 = vadd.xlane.f32.xlu0 %v352
        %v358 = vpop.xlane.xlu0 %357
        %v359 = vmul.f32 %v358, 0.015625
        %v360 = vsub.f32 %v352, %v359
        %v361 = vlaneseq
        %v362 = vand.u32 %v361, 127
        %vm363 = vcmp.lt.s32.totalorder %v362, 64
        %v364 = vsel %vm363, %v360, 0.0
        %v365 = vmul.f32 %v364, %v364
        %366 = vadd.xlane.f32.xlu0 %v365
        %v367 = vpop.xlane.xlu0 %366
        %v368 = vmul.f32 %v367, 0.015625
        %v369 = vadd.f32 %v368, 1e-05
        %v370 = vrsqrt.pop %v369
        %v371 = vmul.f32 %v364, %v370
        %v372 = vld [vmem:[#allocation7 + $0x1] sm:$0x1]
        %v373 = vlaneseq
        %v374 = vshrl.u32 %v373, 7
        %v375 = vsub.s32 0, %v374
        %v376 = vrot.slane %v372, %v375
        %v377 = vmul.f32 %v371, %v376
        %v378 = vld [vmem:[#allocation7 + $0x2] sm:$0x1]
        %v379 = vlaneseq
        %v380 = vshrl.u32 %v379, 7
        %v381 = vsub.s32 0, %v380
        %v382 = vrot.slane %v378, %v381
        %v383 = vadd.f32 %v377, %v382
        %v384 = vmax.f32 %v383, 0.0
        %v385 = vpack.c.bf16 %v384, %v384
        %v386 = vld [vmem:[#allocation8] sm:$0xf]
        %v387 = vld [vmem:[#allocation8 + $0x4] sm:$0xf]
        %v388 = vld [vmem:[#allocation8 + $0x8] sm:$0xf]
        %v389 = vld [vmem:[#allocation8 + $0xc] sm:$0xf]
        %v390 = vld [vmem:[#allocation8 + $0x10] sm:$0xf]
        %v391 = vld [vmem:[#allocation8 + $0x14] sm:$0xf]
        %v392 = vld [vmem:[#allocation8 + $0x18] sm:$0xf]
        %v393 = vld [vmem:[#allocation8 + $0x1c] sm:$0xf]
        %v394 = vld [vmem:[#allocation8 + $0x20] sm:$0xf]
        %v395 = vld [vmem:[#allocation8 + $0x24] sm:$0xf]
        %v396 = vld [vmem:[#allocation8 + $0x28] sm:$0xf]
        %v397 = vld [vmem:[#allocation8 + $0x2c] sm:$0xf]
        %v398 = vld [vmem:[#allocation8 + $0x30] sm:$0xf]
        %v399 = vld [vmem:[#allocation8 + $0x34] sm:$0xf]
        %v400 = vld [vmem:[#allocation8 + $0x38] sm:$0xf]
        %v401 = vld [vmem:[#allocation8 + $0x3c] sm:$0xf]
        %v402 = vld [vmem:[%s4] sm:$0x1]
        %v404 = vlaneseq
        %v405 = vshrl.u32 %v404, 7
        %v406 = vsub.s32 0, %v405
        %v407 = vrot.slane %v402, %v406
        %v425 = vunpack.c.l.b16 %v386
        %v426 = vunpack.c.l.b16 %v387
        %v427 = vunpack.c.l.b16 %v388
        %v428 = vunpack.c.l.b16 %v389
        %v429 = vunpack.c.l.b16 %v390
        %v430 = vunpack.c.l.b16 %v391
        %v431 = vunpack.c.l.b16 %v392
        %v432 = vunpack.c.l.b16 %v393
        %v433 = vunpack.c.l.b16 %v394
        %v434 = vunpack.c.l.b16 %v395
        %v435 = vunpack.c.l.b16 %v396
        %v436 = vunpack.c.l.b16 %v397
        %v437 = vunpack.c.l.b16 %v398
        %v438 = vunpack.c.l.b16 %v399
        %v439 = vunpack.c.l.b16 %v400
        %v440 = vunpack.c.l.b16 %v401
        %v441 = vpack.c.b16 %v426, %v425
        %v442 = vpack.c.b16 %v428, %v427
        %v443 = vpack.c.b16 %v430, %v429
        %v444 = vpack.c.b16 %v432, %v431
        %v445 = vpack.c.b16 %v434, %v433
        %v446 = vpack.c.b16 %v436, %v435
        %v447 = vpack.c.b16 %v438, %v437
        %v448 = vpack.c.b16 %v440, %v439
        %457 = vmatprep.subr.bf16.mxu0 0
        %458 = vmatpush1.bf16.msra.mxu0 %v448
        %459 = vmatprep.subr.bf16.mxu0 0
        %460 = vmatpush1.bf16.msra.mxu0 %v447
        %461 = vmatprep.subr.bf16.mxu0 0
        %462 = vmatpush1.bf16.msra.mxu0 %v446
        %463 = vmatprep.subr.bf16.mxu0 0
        %464 = vmatpush1.bf16.msra.mxu0 %v445
        %465 = vmatprep.subr.bf16.mxu0 0
        %466 = vmatpush1.bf16.msra.mxu0 %v444
        %467 = vmatprep.subr.bf16.mxu0 0
        %468 = vmatpush1.bf16.msra.mxu0 %v443
        %469 = vmatprep.subr.bf16.mxu0 0
        %470 = vmatpush1.bf16.msra.mxu0 %v442
        %471 = vmatprep.subr.bf16.mxu0 0
        %472 = vmatpush1.bf16.msra.mxu0 %v441
        %473 = vmatprep.subr.bf16.mxu0 0
        %474 = vmatpush2.bf16.msra.mxu0 0
        %475 = vmatprep.subr.bf16.mxu0 0
        %476 = vmatpush2.bf16.msra.mxu0 0
        %477 = vmatprep.subr.bf16.mxu0 0
        %478 = vmatpush2.bf16.msra.mxu0 0
        %479 = vmatprep.subr.bf16.mxu0 0
        %480 = vmatpush2.bf16.msra.mxu0 0
        %481 = vmatprep.subr.bf16.mxu0 0
        %482 = vmatpush2.bf16.msra.mxu0 0
        %483 = vmatprep.subr.bf16.mxu0 0
        %484 = vmatpush2.bf16.msra.mxu0 0
        %485 = vmatprep.subr.bf16.mxu0 0
        %486 = vmatpush2.bf16.msra.mxu0 0
        %487 = vmatprep.subr.bf16.mxu0 0
        %488 = vmatpush2.bf16.msra.mxu0 0
        %489 = vmatprep.mubr.bf16.mxu0 0
        %490 = vmatmul.mubr.bf16.gmra.mxu0 %v385
        %v491 = vpop.f32.mrf.mxu0
        %v492 = vadd.f32 %v407, %v491
        %v493 = vpop.f32.mrf.mxu0
        %v494 = vpop.f32.mrf.mxu0
        %v495 = vpop.f32.mrf.mxu0
        %496 = vdwg.mxu0
        %497 = vst [vmem:[%s281] sm:$0xff] %v492
        %s498 = sand.u32 %s142, 1
        %s499 = scalar_lea.sflag [#allocation4], %s498
        %s500 = sand.u32 %s142, 1
        %s501 = smul.addr %s500, 8
        %s502 = scalar_lea.vmem [#allocation10], %s501
        // Predicated region
        $region57: #{tpu_custom_call.1} parent=39 // pred_check
          %p503 = pneg %p152
        $region58: #{tpu_custom_call.1} parent=39 // pred_check_branch
          %505 = sbr.rel (%p503) target = $region60
        $region59: #{tpu_custom_call.1} parent=39 // pred_region
          %s507 = ssub.s32 128, 128
          %508 = vsyncadd %s499, %s507
          %s509 = smul.addr %s24, 128
          %s510 = scalar_lea.hbm %s5, %s509
          %s512 = sshll.u32 %s502, 4
          %s513 = int_to_ptr.vmem [resolvable:$true] %s512
          %515 = dma.vmem_to_hbm [thread:$0]  %s513, 128, %s510, %s499
        $region60: #{tpu_custom_call.1} parent=39 // pred_fallthru
          _
      $region40: #{tpu_custom_call.1} parent=5 // pred_fallthru
        _
      %p516 = scmp.le.s32.totalorder 2, %s19
      // Predicated region
      $region61: #{tpu_custom_call.1} parent=5 // pred_check
        %p517 = pneg %p516
      $region62: #{tpu_custom_call.1} parent=5 // pred_check_branch
        %519 = sbr.rel (%p517) target = $region64
      $region63: #{tpu_custom_call.1} parent=5 // pred_region
        %s520 = ssub.s32 %s19, 2
        // Predicated region
        $region65: #{tpu_custom_call.1} parent=63 // pred_check
          %p521 = pneg %p158
        $region66: #{tpu_custom_call.1} parent=63 // pred_check_branch
          %523 = sbr.rel (%p521) target = $region68
        $region67: #{tpu_custom_call.1} parent=63 // pred_region
          %s524 = sand.u32 %s143, 1
          %s525 = scalar_lea.sflag [#allocation4], %s524
          %s526 = sand.u32 %s143, 1
          %s527 = smul.addr %s526, 8
          %s528 = scalar_lea.vmem [#allocation10], %s527
          %529 = dma.done %s525, 128
        $region68: #{tpu_custom_call.1} parent=63 // pred_fallthru
          _
      $region64: #{tpu_custom_call.1} parent=5 // pred_fallthru
        _
    $region6: #{tpu_custom_call.1} parent=1 // loop_footer
      %s23 = sadd.s32 1, %s19
    $region7: #{tpu_custom_call.1} parent=1 // loop_footer_branch
      %18 = sbr.rel target = $region3
    $region8: #{tpu_custom_call.1} parent=1 // loop_exit
      _
    %530 = vsyncpa [#allocation3], 1
    %s531 = scalar_lea.sflag [#allocation3], 1
    %532 = vsyncpa %s531, 1
    %533 = vsyncpa [#allocation6], 1
    %534 = vsyncpa [#allocation9], 1
    %535 = vsyncpa [#allocation4], 1
    %s536 = scalar_lea.sflag [#allocation4], 1
    %537 = vsyncpa %s536, 1

</llo_original>
